<compile_context>
chip_gen: v6e
topology: v6e:2x2x1
jax: 0.10.0
libtpu: 0.0.40
codegen_flags: <defaults>
</compile_context>

<pallas_src>
import jax
import jax.numpy as jnp
from jax.experimental import pallas as pl
from jax.experimental.pallas import tpu as pltpu


def _leaky_relu(v, slope=0.03):
    # For 0 < slope < 1, max(v, slope*v) == LeakyReLU(slope)(v).
    return jnp.maximum(v, slope * v)


def _learntime_kernel(x_ref, w1_ref, b1_ref, w2_ref, b2_ref, o_ref):
    x = x_ref[...]

    # Layer 1: Linear + LeakyReLU(0.03)  (MXU matmul, f32 accumulate)
    h = jnp.dot(x, w1_ref[...], preferred_element_type=jnp.float32) + b1_ref[...]
    h = _leaky_relu(h)

    # Layer 2: Linear + LeakyReLU(0.03)
    # (astype is a no-op for f32 weights; it only matters if weights are bf16.)
    y = jnp.dot(h.astype(w2_ref.dtype), w2_ref[...],
                preferred_element_type=jnp.float32) + b2_ref[...]
    y = _leaky_relu(y)

    o_ref[...] = y.astype(o_ref.dtype)


def learntime_forward(x, w1, b1, w2, b2, *, tile_b=1024):
    """x: (B, in_feat); w1: (in_feat, mid_feat); b1: (mid_feat,);
       w2: (mid_feat, out_feat); b2: (out_feat,). Returns (B, out_feat)."""
    B, in_feat = x.shape
    mid_feat = w1.shape[1]
    out_feat = w2.shape[1]

    # Batch tile: big tiles amortize the per-grid-step overhead; the sublane
    # (second-to-last) block dim must be a multiple of 8.  Feature dims use
    # the full array extent, so they need no 128-alignment.
    tile_b = int(min(tile_b, max(8, ((B + 7) // 8) * 8)))
    tile_b = ((tile_b + 7) // 8) * 8

    # Pad the batch up to a multiple of the tile (sliced off at the end).
    B_pad = ((B + tile_b - 1) // tile_b) * tile_b
    if B_pad != B:
        x = jnp.pad(x, ((0, B_pad - B), (0, 0)))

    b1_2d = b1.reshape(1, mid_feat)
    b2_2d = b2.reshape(1, out_feat)

    itemsize = x.dtype.itemsize
    cost = pl.CostEstimate(
        flops=int(2 * B_pad * (in_feat * mid_feat + mid_feat * out_feat)),
        transcendentals=0,
        bytes_accessed=int(
            (B_pad * in_feat + B_pad * out_feat) * itemsize
            + (w1.size + w2.size + b1.size + b2.size) * itemsize
        ),
    )

    out = pl.pallas_call(
        _learntime_kernel,
        out_shape=jax.ShapeDtypeStruct((B_pad, out_feat), x.dtype),
        grid=(B_pad // tile_b,),
        in_specs=[
            # x streams through VMEM, one batch tile per grid step.
            pl.BlockSpec((tile_b, in_feat), lambda i: (i, 0)),
            # Weights / biases: constant block index -> DMA'd once, resident.
            pl.BlockSpec((in_feat, mid_feat), lambda i: (0, 0)),
            pl.BlockSpec((1, mid_feat), lambda i: (0, 0)),
            pl.BlockSpec((mid_feat, out_feat), lambda i: (0, 0)),
            pl.BlockSpec((1, out_feat), lambda i: (0, 0)),
        ],
        out_specs=pl.BlockSpec((tile_b, out_feat), lambda i: (i, 0)),
        compiler_params=pltpu.CompilerParams(
            # Batch steps are independent -> shard across v7x's 2 TensorCores.
            dimension_semantics=("parallel",),
            # VMEM use is tiny at these feature widths (<1 MiB double-buffered
            # even at tile_b=1024), so the default scoped limit is plenty.
        ),
        cost_estimate=cost,
    )(x, w1, b1_2d, w2, b2_2d)

    return out[:B] if B_pad != B else out


def learntime_reference(x, w1, b1, w2, b2):
    h = _leaky_relu(x @ w1 + b1)
    return _leaky_relu(h @ w2 + b2)


if __name__ == "__main__":
    # Small shapes implied by the module: x is a flat "time" feature vector per sample.
    B, in_feat, mid_feat, out_feat = 8, 16, 32, 16

    key = jax.random.PRNGKey(0)
    kx, kw1, kb1, kw2, kb2 = jax.random.split(key, 5)

    x = jax.random.normal(kx, (B, in_feat), dtype=jnp.float32)

    # Deterministic init mimicking nn.Linear default (uniform in +/- 1/sqrt(fan_in)).
    lim1 = 1.0 / jnp.sqrt(jnp.float32(in_feat))
    lim2 = 1.0 / jnp.sqrt(jnp.float32(mid_feat))
    w1 = jax.random.uniform(kw1, (in_feat, mid_feat), jnp.float32, -lim1, lim1)
    b1 = jax.random.uniform(kb1, (mid_feat,), jnp.float32, -lim1, lim1)
    w2 = jax.random.uniform(kw2, (mid_feat, out_feat), jnp.float32, -lim2, lim2)
    b2 = jax.random.uniform(kb2, (out_feat,), jnp.float32, -lim2, lim2)

    # Tiny-batch check (single grid step).
    out = jax.block_until_ready(learntime_forward(x, w1, b1, w2, b2))
    ref = learntime_reference(x, w1, b1, w2, b2)
    assert out.shape == (B, out_feat)
    assert jnp.allclose(out, ref, atol=1e-5, rtol=1e-5), "mismatch vs reference (small B)"

    # Larger, non-multiple-of-tile batch exercises the grid + padding path.
    B2 = 1000
    x2 = jax.random.normal(jax.random.PRNGKey(1), (B2, in_feat), dtype=jnp.float32)
    out2 = jax.block_until_ready(learntime_forward(x2, w1, b1, w2, b2, tile_b=256))
    ref2 = learntime_reference(x2, w1, b1, w2, b2)
    assert out2.shape == (B2, out_feat)
    assert jnp.allclose(out2, ref2, atol=1e-5, rtol=1e-5), "mismatch vs reference (large B)"

    print("KERNEL_OK")
</pallas_src>

<mosaic_0001>
module attributes {stable_mosaic.version = 11 : i64} {
  func.func @_learntime_kernel(%arg0: i32, %arg1: memref<8x16xf32, #tpu.memory_space<vmem>>, %arg2: memref<16x32xf32, #tpu.memory_space<vmem>>, %arg3: memref<1x32xf32, #tpu.memory_space<vmem>>, %arg4: memref<32x16xf32, #tpu.memory_space<vmem>>, %arg5: memref<1x16xf32, #tpu.memory_space<vmem>>, %arg6: memref<8x16xf32, #tpu.memory_space<vmem>>) attributes {dimension_semantics = [#tpu.dimension_semantics<parallel>], iteration_bounds = array<i64: 1>, scalar_prefetch = 0 : i64, scratch_operands = 0 : i64, tpu.core_type = #tpu.core_type<tc>, window_params = [{transform_indices = @transform_0, window_bounds = array<i64: 8, 16>}, {pipeline_mode = #tpu.pipeline_mode<synchronous>, transform_indices = @transform_1, window_bounds = array<i64: 16, 32>}, {pipeline_mode = #tpu.pipeline_mode<synchronous>, transform_indices = @transform_2, window_bounds = array<i64: 1, 32>}, {pipeline_mode = #tpu.pipeline_mode<synchronous>, transform_indices = @transform_3, window_bounds = array<i64: 32, 16>}, {pipeline_mode = #tpu.pipeline_mode<synchronous>, transform_indices = @transform_4, window_bounds = array<i64: 1, 16>}, {transform_indices = @transform_5, window_bounds = array<i64: 8, 16>}]} {
    %c0 = arith.constant 0 : index
    %c0_0 = arith.constant 0 : index
    %0 = vector.load %arg1[%c0, %c0_0] : memref<8x16xf32, #tpu.memory_space<vmem>>, vector<8x16xf32>
    %c0_1 = arith.constant 0 : index
    %c0_2 = arith.constant 0 : index
    %1 = vector.load %arg2[%c0_1, %c0_2] : memref<16x32xf32, #tpu.memory_space<vmem>>, vector<16x32xf32>
    %cst = arith.constant dense<0.000000e+00> : vector<8x32xf32>
    %2 = tpu.matmul %0, %1, %cst {dimension_numbers = #tpu.dot_dimension_numbers<[1], [0], [0], [1], [0, 0, 1, 1], [], []>} : vector<8x16xf32>, vector<16x32xf32>, vector<8x32xf32> -> vector<8x32xf32>
    %c0_3 = arith.constant 0 : index
    %c0_4 = arith.constant 0 : index
    %3 = vector.load %arg3[%c0_3, %c0_4] : memref<1x32xf32, #tpu.memory_space<vmem>>, vector<1x32xf32>
    %4 = vector.broadcast %3 : vector<1x32xf32> to vector<8x32xf32>
    %5 = arith.addf %2, %4 : vector<8x32xf32>
    %cst_5 = arith.constant 3.000000e-02 : f32
    %6 = vector.broadcast %cst_5 : f32 to vector<8x32xf32>
    %7 = arith.mulf %6, %5 : vector<8x32xf32>
    %8 = arith.maximumf %5, %7 : vector<8x32xf32>
    %c0_6 = arith.constant 0 : index
    %c0_7 = arith.constant 0 : index
    %9 = vector.load %arg4[%c0_6, %c0_7] : memref<32x16xf32, #tpu.memory_space<vmem>>, vector<32x16xf32>
    %cst_8 = arith.constant dense<0.000000e+00> : vector<8x16xf32>
    %10 = tpu.matmul %8, %9, %cst_8 {dimension_numbers = #tpu.dot_dimension_numbers<[1], [0], [0], [1], [0, 0, 1, 1], [], []>} : vector<8x32xf32>, vector<32x16xf32>, vector<8x16xf32> -> vector<8x16xf32>
    %c0_9 = arith.constant 0 : index
    %c0_10 = arith.constant 0 : index
    %11 = vector.load %arg5[%c0_9, %c0_10] : memref<1x16xf32, #tpu.memory_space<vmem>>, vector<1x16xf32>
    %12 = vector.broadcast %11 : vector<1x16xf32> to vector<8x16xf32>
    %13 = arith.addf %10, %12 : vector<8x16xf32>
    %cst_11 = arith.constant 3.000000e-02 : f32
    %14 = vector.broadcast %cst_11 : f32 to vector<8x16xf32>
    %15 = arith.mulf %14, %13 : vector<8x16xf32>
    %16 = arith.maximumf %13, %15 : vector<8x16xf32>
    %c0_12 = arith.constant 0 : index
    %c0_13 = arith.constant 0 : index
    %17 = vector.load %arg6[%c0_12, %c0_13] : memref<8x16xf32, #tpu.memory_space<vmem>>, vector<8x16xf32>
    tpu.vector_store %arg6[%c0_12, %c0_13], %16 {strides = array<i32>} : memref<8x16xf32, #tpu.memory_space<vmem>>, vector<8x16xf32>,
    return
  }
  func.func @transform_0(%arg0: i32) -> (i32, i32) {
    %c0_i32 = arith.constant 0 : i32
    %c0_i32_0 = arith.constant 0 : i32
    return %arg0, %c0_i32 : i32, i32
  }
  func.func @transform_1(%arg0: i32) -> (i32, i32) {
    %c0_i32 = arith.constant 0 : i32
    %c0_i32_0 = arith.constant 0 : i32
    %c0_i32_1 = arith.constant 0 : i32
    return %c0_i32, %c0_i32_0 : i32, i32
  }
  func.func @transform_2(%arg0: i32) -> (i32, i32) {
    %c0_i32 = arith.constant 0 : i32
    %c0_i32_0 = arith.constant 0 : i32
    %c0_i32_1 = arith.constant 0 : i32
    return %c0_i32, %c0_i32_0 : i32, i32
  }
  func.func @transform_3(%arg0: i32) -> (i32, i32) {
    %c0_i32 = arith.constant 0 : i32
    %c0_i32_0 = arith.constant 0 : i32
    %c0_i32_1 = arith.constant 0 : i32
    return %c0_i32, %c0_i32_0 : i32, i32
  }
  func.func @transform_4(%arg0: i32) -> (i32, i32) {
    %c0_i32 = arith.constant 0 : i32
    %c0_i32_0 = arith.constant 0 : i32
    %c0_i32_1 = arith.constant 0 : i32
    return %c0_i32, %c0_i32_0 : i32, i32
  }
  func.func @transform_5(%arg0: i32) -> (i32, i32) {
    %c0_i32 = arith.constant 0 : i32
    %c0_i32_0 = arith.constant 0 : i32
    return %arg0, %c0_i32 : i32, i32
  }
}

</mosaic_0001>

<llo_original>
// kernel: tpu_custom_call.1
$region0: #{tpu_custom_call.1}
  #allocation0 [shape = 'u32[]', space=smem, size = 0x4, offset = 0x4, fixed_abs, tag = 'smem constant byte address 0x4 - core index']
  #allocation1 [shape = 'u32[144,128]{1,0:T(1,128)}', space=vmem, size = 0x12000, scoped, tag = 'internal scratch']
  %s0 = inlined_call_operand.vmem [shape: f32[8,16], index: 0, kind: input, shape index: {}]
  %s1 = inlined_call_operand.vmem [shape: f32[16,32], index: 1, kind: input, shape index: {}]
  %s2 = inlined_call_operand.vmem [shape: f32[1,32], index: 2, kind: input, shape index: {}]
  %s3 = inlined_call_operand.vmem [shape: f32[32,16], index: 3, kind: input, shape index: {}]
  %s4 = inlined_call_operand.vmem [shape: f32[1,16], index: 4, kind: input, shape index: {}]
  %s5 = inlined_call_operand.hbm [shape: f32[8,16], index: 5, kind: output, shape index: {}]
  %s6 = sld [smem:[#allocation0]]
  $region30: #{tpu_custom_call.1} parent=0
    _
  %s8 = ssub.s32 1, %s6
  %s9 = scalar_select 0, %s8, %s6
  $region1: #{tpu_custom_call.1} parent=0
    #allocation2 [shape = 'u8[4096]{0}', space=vmem, size = 0x1000, scoped, tag = 'output window, operand 0, single buffered']
    #allocation3 [shape = 's32[1]{0}', space=sflag, size = 0x4, scoped, tag = 'scoped memory for tpu_custom_call.1']
    %10 = vsyncpa [#allocation3], 0
    // Predicated region
    $region2: #{tpu_custom_call.1} parent=1 // pred_check
      _
    $region3: #{tpu_custom_call.1} parent=1 // pred_check_branch
      %12 = sbr.rel (0) target = $region5
    $region4: #{tpu_custom_call.1} parent=1 // pred_region
      _
    $region5: #{tpu_custom_call.1} parent=1 // pred_fallthru
      _
    // Predicated region
    $region6: #{tpu_custom_call.1} parent=1 // pred_check
      _
    $region7: #{tpu_custom_call.1} parent=1 // pred_check_branch
      %14 = sbr.rel (0) target = $region9
    $region8: #{tpu_custom_call.1} parent=1 // pred_region
      _
    $region9: #{tpu_custom_call.1} parent=1 // pred_fallthru
      _
    // Predicated region
    $region10: #{tpu_custom_call.1} parent=1 // pred_check
      _
    $region11: #{tpu_custom_call.1} parent=1 // pred_check_branch
      %16 = sbr.rel (0) target = $region13
    $region12: #{tpu_custom_call.1} parent=1 // pred_region
      _
    $region13: #{tpu_custom_call.1} parent=1 // pred_fallthru
      _
    // Predicated region
    $region14: #{tpu_custom_call.1} parent=1 // pred_check
      _
    $region15: #{tpu_custom_call.1} parent=1 // pred_check_branch
      %18 = sbr.rel (0) target = $region17
    $region16: #{tpu_custom_call.1} parent=1 // pred_region
      _
    $region17: #{tpu_custom_call.1} parent=1 // pred_fallthru
      _
    // Predicated region
    $region18: #{tpu_custom_call.1} parent=1 // pred_check
      _
    $region19: #{tpu_custom_call.1} parent=1 // pred_check_branch
      %20 = sbr.rel (0) target = $region21
    $region20: #{tpu_custom_call.1} parent=1 // pred_region
      _
    $region21: #{tpu_custom_call.1} parent=1 // pred_fallthru
      _
    %v21 = vld [vmem:[%s0] sm:$0xff]
    %v22 = vld [vmem:[%s1] sm:$0xff]
    %v23 = vld [vmem:[%s1 + $0x8] sm:$0xff]
    %v24 = vld [vmem:[%s2] sm:$0x1]
    %v26 = vlaneseq
    %v27 = vshrl.u32 %v26, 7
    %v28 = vsub.s32 0, %v27
    %v29 = vrot.slane %v24, %v28
    %vm31 = vcmask 130048
    %v33 = vsel %vm31, %v21, 0
    %35 = vmatprep.subr.mxu0 0.0
    %36 = vmatpush1.msra.mxu0 0.0
    %37 = vmatprep.subr.mxu0 0.0
    %38 = vmatpush1.msra.mxu0 0.0
    %39 = vmatprep.subr.mxu0 0.0
    %40 = vmatpush1.msra.mxu0 0.0
    %41 = vmatprep.subr.mxu0 0.0
    %42 = vmatpush1.msra.mxu0 0.0
    %43 = vmatprep.subr.mxu0 0.0
    %44 = vmatpush1.msra.mxu0 0.0
    %45 = vmatprep.subr.mxu0 0.0
    %46 = vmatpush1.msra.mxu0 0.0
    %47 = vmatprep.subr.mxu0 0.0
    %48 = vmatpush1.msra.mxu0 0.0
    %49 = vmatprep.subr.mxu0 0.0
    %50 = vmatpush1.msra.mxu0 0.0
    %51 = vmatprep.subr.mxu0 0.0
    %52 = vmatpush1.msra.mxu0 0.0
    %53 = vmatprep.subr.mxu0 0.0
    %54 = vmatpush1.msra.mxu0 0.0
    %55 = vmatprep.subr.mxu0 0.0
    %56 = vmatpush1.msra.mxu0 0.0
    %57 = vmatprep.subr.mxu0 0.0
    %58 = vmatpush1.msra.mxu0 0.0
    %59 = vmatprep.subr.mxu0 0.0
    %60 = vmatpush1.msra.mxu0 0.0
    %61 = vmatprep.subr.mxu0 0.0
    %62 = vmatpush1.msra.mxu0 0.0
    %63 = vmatprep.subr.mxu0 0.0
    %64 = vmatpush1.msra.mxu0 %v23
    %65 = vmatprep.subr.mxu0 0.0
    %66 = vmatpush1.msra.mxu0 %v22
    %67 = vmatprep.subr.mxu0 0.0
    %68 = vmatpush2.msra.mxu0 0.0
    %69 = vmatprep.subr.mxu0 0.0
    %70 = vmatpush2.msra.mxu0 0.0
    %71 = vmatprep.subr.mxu0 0.0
    %72 = vmatpush2.msra.mxu0 0.0
    %73 = vmatprep.subr.mxu0 0.0
    %74 = vmatpush2.msra.mxu0 0.0
    %75 = vmatprep.subr.mxu0 0.0
    %76 = vmatpush2.msra.mxu0 0.0
    %77 = vmatprep.subr.mxu0 0.0
    %78 = vmatpush2.msra.mxu0 0.0
    %79 = vmatprep.subr.mxu0 0.0
    %80 = vmatpush2.msra.mxu0 0.0
    %81 = vmatprep.subr.mxu0 0.0
    %82 = vmatpush2.msra.mxu0 0.0
    %83 = vmatprep.subr.mxu0 0.0
    %84 = vmatpush2.msra.mxu0 0.0
    %85 = vmatprep.subr.mxu0 0.0
    %86 = vmatpush2.msra.mxu0 0.0
    %87 = vmatprep.subr.mxu0 0.0
    %88 = vmatpush2.msra.mxu0 0.0
    %89 = vmatprep.subr.mxu0 0.0
    %90 = vmatpush2.msra.mxu0 0.0
    %91 = vmatprep.subr.mxu0 0.0
    %92 = vmatpush2.msra.mxu0 0.0
    %93 = vmatprep.subr.mxu0 0.0
    %94 = vmatpush2.msra.mxu0 0.0
    %95 = vmatprep.subr.mxu0 0.0
    %96 = vmatpush2.msra.mxu0 0.0
    %97 = vmatprep.subr.mxu0 0.0
    %98 = vmatpush2.msra.mxu0 0.0
    %99 = vmatprep.mubr.f32.mxu0 0.0
    %100 = vmatmul.mubr.f32.gmra.mxu0 %v33
    %v101 = vpop.f32.mrf.mxu0
    %v102 = vadd.f32 %v29, %v101
    %v103 = vpop.f32.mrf.mxu0
    %104 = vdwg.mxu0
    %v105 = vmul.f32 %v102, 0.03
    %v106 = vmax.f32 %v102, %v105
    %v107 = vld [vmem:[%s3] sm:$0xff]
    %v108 = vld [vmem:[%s3 + $0x8] sm:$0xff]
    %v109 = vld [vmem:[%s3 + $0x10] sm:$0xff]
    %v110 = vld [vmem:[%s3 + $0x18] sm:$0xff]
    %v111 = vld [vmem:[%s4] sm:$0x1]
    %v113 = vlaneseq
    %v114 = vshrl.u32 %v113, 7
    %v115 = vsub.s32 0, %v114
    %v116 = vrot.slane %v111, %v115
    %vm118 = vcmask 261120
    %v120 = vsel %vm118, %v106, 0
    %122 = vmatprep.subr.mxu0 0.0
    %123 = vmatpush1.msra.mxu0 0.0
    %124 = vmatprep.subr.mxu0 0.0
    %125 = vmatpush1.msra.mxu0 0.0
    %126 = vmatprep.subr.mxu0 0.0
    %127 = vmatpush1.msra.mxu0 0.0
    %128 = vmatprep.subr.mxu0 0.0
    %129 = vmatpush1.msra.mxu0 0.0
    %130 = vmatprep.subr.mxu0 0.0
    %131 = vmatpush1.msra.mxu0 0.0
    %132 = vmatprep.subr.mxu0 0.0
    %133 = vmatpush1.msra.mxu0 0.0
    %134 = vmatprep.subr.mxu0 0.0
    %135 = vmatpush1.msra.mxu0 0.0
    %136 = vmatprep.subr.mxu0 0.0
    %137 = vmatpush1.msra.mxu0 0.0
    %138 = vmatprep.subr.mxu0 0.0
    %139 = vmatpush1.msra.mxu0 0.0
    %140 = vmatprep.subr.mxu0 0.0
    %141 = vmatpush1.msra.mxu0 0.0
    %142 = vmatprep.subr.mxu0 0.0
    %143 = vmatpush1.msra.mxu0 0.0
    %144 = vmatprep.subr.mxu0 0.0
    %145 = vmatpush1.msra.mxu0 0.0
    %146 = vmatprep.subr.mxu0 0.0
    %147 = vmatpush1.msra.mxu0 %v110
    %148 = vmatprep.subr.mxu0 0.0
    %149 = vmatpush1.msra.mxu0 %v109
    %150 = vmatprep.subr.mxu0 0.0
    %151 = vmatpush1.msra.mxu0 %v108
    %152 = vmatprep.subr.mxu0 0.0
    %153 = vmatpush1.msra.mxu0 %v107
    %154 = vmatprep.subr.mxu0 0.0
    %155 = vmatpush2.msra.mxu0 0.0
    %156 = vmatprep.subr.mxu0 0.0
    %157 = vmatpush2.msra.mxu0 0.0
    %158 = vmatprep.subr.mxu0 0.0
    %159 = vmatpush2.msra.mxu0 0.0
    %160 = vmatprep.subr.mxu0 0.0
    %161 = vmatpush2.msra.mxu0 0.0
    %162 = vmatprep.subr.mxu0 0.0
    %163 = vmatpush2.msra.mxu0 0.0
    %164 = vmatprep.subr.mxu0 0.0
    %165 = vmatpush2.msra.mxu0 0.0
    %166 = vmatprep.subr.mxu0 0.0
    %167 = vmatpush2.msra.mxu0 0.0
    %168 = vmatprep.subr.mxu0 0.0
    %169 = vmatpush2.msra.mxu0 0.0
    %170 = vmatprep.subr.mxu0 0.0
    %171 = vmatpush2.msra.mxu0 0.0
    %172 = vmatprep.subr.mxu0 0.0
    %173 = vmatpush2.msra.mxu0 0.0
    %174 = vmatprep.subr.mxu0 0.0
    %175 = vmatpush2.msra.mxu0 0.0
    %176 = vmatprep.subr.mxu0 0.0
    %177 = vmatpush2.msra.mxu0 0.0
    %178 = vmatprep.subr.mxu0 0.0
    %179 = vmatpush2.msra.mxu0 0.0
    %180 = vmatprep.subr.mxu0 0.0
    %181 = vmatpush2.msra.mxu0 0.0
    %182 = vmatprep.subr.mxu0 0.0
    %183 = vmatpush2.msra.mxu0 0.0
    %184 = vmatprep.subr.mxu0 0.0
    %185 = vmatpush2.msra.mxu0 0.0
    %186 = vmatprep.mubr.f32.mxu0 0.0
    %187 = vmatmul.mubr.f32.gmra.mxu0 %v120
    %v188 = vpop.f32.mrf.mxu0
    %v189 = vadd.f32 %v116, %v188
    %v190 = vpop.f32.mrf.mxu0
    %191 = vdwg.mxu0
    %v192 = vmul.f32 %v189, 0.03
    %v193 = vmax.f32 %v189, %v192
    %194 = vst.msk [vmem:[#allocation2] sm:$0xff] %vm31, %v193
    // Predicated region
    $region22: #{tpu_custom_call.1} parent=1 // pred_check
      _
    $region23: #{tpu_custom_call.1} parent=1 // pred_check_branch
      %196 = sbr.rel (0) target = $region25
    $region24: #{tpu_custom_call.1} parent=1 // pred_region
      %s198 = ssub.s32 128, 128
      %199 = vsyncadd [#allocation3], %s198
      %s201 = sshll.u32 [#allocation2], 4
      %s202 = int_to_ptr.vmem [resolvable:$true] %s201
      %204 = dma.vmem_to_hbm [thread:$0]  %s202, 128, %s5, [#allocation3]
    $region25: #{tpu_custom_call.1} parent=1 // pred_fallthru
      _
    // Predicated region
    $region26: #{tpu_custom_call.1} parent=1 // pred_check
      _
    $region27: #{tpu_custom_call.1} parent=1 // pred_check_branch
      %206 = sbr.rel (0) target = $region29
    $region28: #{tpu_custom_call.1} parent=1 // pred_region
      %207 = dma.done [#allocation3], 128
    $region29: #{tpu_custom_call.1} parent=1 // pred_fallthru
      _
    %208 = vsyncpa [#allocation3], 1

</llo_original>
